<compile_context>
chip_gen: v6e
topology: v6e:2x2x1
jax: 0.10.0
libtpu: 0.0.40
codegen_flags: <defaults>
</compile_context>

<pallas_src>
import functools

import jax
import jax.numpy as jnp
from jax.experimental import pallas as pl
from jax.experimental.pallas import tpu as pltpu


def _round_up(x, m):
    return ((x + m - 1) // m) * m


def _focal_loss_tile_kernel(x_ref, t_ref, a_ref, o_ref, *, gamma, tile_n, n_rows):
    i = pl.program_id(0)

    x = x_ref[...].astype(jnp.float32)      # (TILE_N, C_pad) logits
    t = t_ref[...]                          # (TILE_N, 1) int32 class ids
    a = a_ref[...].astype(jnp.float32)      # (1, C_pad) per-class alpha

    # log softmax(x)[target] via log-sum-exp (never materializes softmax probs
    # before the log -> no log(0) underflow for confident-wrong rows).
    m = jnp.max(x, axis=1, keepdims=True)                     # (TILE_N, 1)
    denom = jnp.sum(jnp.exp(x - m), axis=1, keepdims=True)    # (TILE_N, 1)

    # One-hot of the target class (== scatter_(1, ids, 1.0) in torch).
    col = jax.lax.broadcasted_iota(jnp.int32, x.shape, 1)     # (TILE_N, C_pad)
    mask = (col == t).astype(jnp.float32)

    x_t = jnp.sum(x * mask, axis=1, keepdims=True)            # target logit
    alpha_sel = jnp.sum(a * mask, axis=1, keepdims=True)      # alpha[target]

    log_p = x_t - m - jnp.log(denom)                          # (TILE_N, 1)
    probs = jnp.exp(log_p)
    u = 1.0 - probs

    g = float(gamma)
    if g == 2.0:
        focal = u * u                     # exact, single VPU multiply
    elif g == 1.0:
        focal = u
    elif g == 0.0:
        focal = jnp.ones_like(u)
    elif g == 3.0:
        focal = u * u * u
    else:
        focal = jnp.power(u, g)           # general (float) gamma fallback

    per_row = -alpha_sel * focal * log_p                      # (TILE_N, 1)

    # Mask rows that are padding past the true batch size N.
    row = i * tile_n + jax.lax.broadcasted_iota(jnp.int32, per_row.shape, 0)
    valid = (row < n_rows).astype(jnp.float32)

    o_ref[0, 0] = jnp.sum(per_row * valid)                    # per-tile partial


def focal_loss(inputs, targets, alpha=None, gamma=2.0, size_average=True,
               max_tile_bytes=4 * 1024 * 1024):
    """Focal loss matching the PyTorch FocalLoss.forward.

    inputs:  (N, C) logits, any float dtype (cast to f32 inside the kernel).
    targets: (N,) integer class ids.
    alpha:   (C,), (C, 1) or None (=> ones, like the module default).
    """
    n, c = inputs.shape
    targets2d = targets.reshape(n, 1).astype(jnp.int32)
    if alpha is None:
        alpha2d = jnp.ones((1, c), jnp.float32)
    else:
        alpha2d = jnp.asarray(alpha, jnp.float32).reshape(1, c)

    # --- lane-dense padding of the class axis (multiple of 128) -------------
    c_pad = _round_up(c, 128)
    if c_pad != c:
        neg_big = jnp.asarray(-1e30, inputs.dtype)   # exp underflows to 0
        inputs = jnp.pad(inputs, ((0, 0), (0, c_pad - c)), constant_values=neg_big)
        alpha2d = jnp.pad(alpha2d, ((0, 0), (0, c_pad - c)))

    # --- batch tiling: biggest tile that keeps the double-buffered DMA small -
    itemsize = jnp.dtype(inputs.dtype).itemsize
    rows_fit = max(8, (max_tile_bytes // (c_pad * itemsize)) // 8 * 8)
    tile_n = int(min(rows_fit, 1024, _round_up(n, 8)))
    n_pad = _round_up(n, tile_n)
    if n_pad != n:
        inputs = jnp.pad(inputs, ((0, n_pad - n), (0, 0)))
        targets2d = jnp.pad(targets2d, ((0, n_pad - n), (0, 0)))
    num_tiles = n_pad // tile_n

    kernel = functools.partial(
        _focal_loss_tile_kernel, gamma=float(gamma), tile_n=tile_n, n_rows=n)

    partials = pl.pallas_call(
        kernel,
        out_shape=jax.ShapeDtypeStruct((num_tiles, 1), jnp.float32),
        grid=(num_tiles,),
        in_specs=[
            pl.BlockSpec((tile_n, c_pad), lambda i: (i, 0)),   # logits tile
            pl.BlockSpec((tile_n, 1), lambda i: (i, 0)),       # target ids tile
            pl.BlockSpec((1, c_pad), lambda i: (0, 0)),        # alpha (replicated)
        ],
        out_specs=pl.BlockSpec((1, 1), lambda i: (i, 0),
                               memory_space=pltpu.SMEM),       # per-tile partial
        compiler_params=pltpu.CompilerParams(
            dimension_semantics=("parallel",),                 # shard tiles on v7x's 2 TCs
            vmem_limit_bytes=32 * 1024 * 1024,                 # safe on v5e/v6e/v7x
        ),
    )(inputs, targets2d, alpha2d)

    total = jnp.sum(partials)                                  # tiny host-side reduce
    if size_average:
        total = total / jnp.float32(n)
    return total


if __name__ == "__main__":
    key = jax.random.PRNGKey(0)
    k1, k2 = jax.random.split(key)

    N, C = 8, 32  # batch of 8 observations, 32 classes
    inputs = jax.random.normal(k1, (N, C), dtype=jnp.float32)
    targets = jax.random.randint(k2, (N,), 0, C, dtype=jnp.int32)

    # Deterministic per-class alpha (module default would be ones(class_num, 1)).
    alpha = jnp.linspace(0.5, 1.5, C, dtype=jnp.float32).reshape(C, 1)
    gamma = 2.0

    loss = focal_loss(inputs, targets, alpha, gamma=gamma, size_average=True)
    loss = jax.block_until_ready(loss)

    # Pure-JAX reference check (same math as the PyTorch module).
    p = jax.nn.softmax(inputs, axis=1)
    probs = p[jnp.arange(N), targets]
    a_sel = alpha.reshape(-1)[targets]
    ref = jnp.mean(-a_sel * (1.0 - probs) ** gamma * jnp.log(probs))
    assert jnp.allclose(loss, ref, rtol=1e-5, atol=1e-5), (loss, ref)

    print("KERNEL_OK")
</pallas_src>

<mosaic_0001>
module attributes {stable_mosaic.version = 11 : i64} {
  func.func @_focal_loss_tile_kernel(%arg0: i32, %arg1: memref<8x128xf32, #tpu.memory_space<vmem>>, %arg2: memref<8x1xi32, #tpu.memory_space<vmem>>, %arg3: memref<1x128xf32, #tpu.memory_space<vmem>>, %arg4: memref<1x1xf32, #tpu.memory_space<smem>>) attributes {dimension_semantics = [#tpu.dimension_semantics<parallel>], iteration_bounds = array<i64: 1>, scalar_prefetch = 0 : i64, scratch_operands = 0 : i64, tpu.core_type = #tpu.core_type<tc>, window_params = [{transform_indices = @transform_0, window_bounds = array<i64: 8, 128>}, {transform_indices = @transform_1, window_bounds = array<i64: 8, 1>}, {pipeline_mode = #tpu.pipeline_mode<synchronous>, transform_indices = @transform_2, window_bounds = array<i64: 1, 128>}, {transform_indices = @transform_3, window_bounds = array<i64: 1, 1>}]} {
    %c0 = arith.constant 0 : index
    %c0_0 = arith.constant 0 : index
    %0 = vector.load %arg1[%c0, %c0_0] : memref<8x128xf32, #tpu.memory_space<vmem>>, vector<8x128xf32>
    %c0_1 = arith.constant 0 : index
    %c0_2 = arith.constant 0 : index
    %1 = vector.load %arg2[%c0_1, %c0_2] : memref<8x1xi32, #tpu.memory_space<vmem>>, vector<8x1xi32>
    %c0_3 = arith.constant 0 : index
    %c0_4 = arith.constant 0 : index
    %2 = vector.load %arg3[%c0_3, %c0_4] : memref<1x128xf32, #tpu.memory_space<vmem>>, vector<1x128xf32>
    %cst = arith.constant dense<0xFF800000> : vector<8xf32>
    %3 = vector.multi_reduction <maximumf>, %0, %cst [1] : vector<8x128xf32> to vector<8xf32>
    %4 = vector.shape_cast %3 : vector<8xf32> to vector<8x1xf32>
    %5 = vector.broadcast %4 : vector<8x1xf32> to vector<8x128xf32>
    %6 = arith.subf %0, %5 : vector<8x128xf32>
    %7 = math.exp %6 : vector<8x128xf32>
    %cst_5 = arith.constant dense<0.000000e+00> : vector<8xf32>
    %8 = vector.multi_reduction <add>, %7, %cst_5 [1] : vector<8x128xf32> to vector<8xf32>
    %9 = vector.shape_cast %8 : vector<8xf32> to vector<8x1xf32>
    %10 = tpu.iota {dimensions = array<i32: 1>} : vector<8x128xi32>
    %11 = vector.broadcast %1 : vector<8x1xi32> to vector<8x128xi32>
    %12 = arith.cmpi eq, %10, %11 : vector<8x128xi32>
    %13 = arith.extui %12 : vector<8x128xi1> to vector<8x128xi32>
    %14 = arith.sitofp %13 : vector<8x128xi32> to vector<8x128xf32>
    %15 = arith.mulf %0, %14 : vector<8x128xf32>
    %cst_6 = arith.constant dense<0.000000e+00> : vector<8xf32>
    %16 = vector.multi_reduction <add>, %15, %cst_6 [1] : vector<8x128xf32> to vector<8xf32>
    %17 = vector.shape_cast %16 : vector<8xf32> to vector<8x1xf32>
    %18 = vector.broadcast %2 : vector<1x128xf32> to vector<8x128xf32>
    %19 = arith.mulf %18, %14 : vector<8x128xf32>
    %cst_7 = arith.constant dense<0.000000e+00> : vector<8xf32>
    %20 = vector.multi_reduction <add>, %19, %cst_7 [1] : vector<8x128xf32> to vector<8xf32>
    %21 = vector.shape_cast %20 : vector<8xf32> to vector<8x1xf32>
    %22 = arith.subf %17, %4 : vector<8x1xf32>
    %23 = math.log %9 : vector<8x1xf32>
    %24 = arith.subf %22, %23 : vector<8x1xf32>
    %25 = math.exp %24 : vector<8x1xf32>
    %cst_8 = arith.constant 1.000000e+00 : f32
    %26 = vector.broadcast %cst_8 : f32 to vector<8x1xf32>
    %27 = arith.subf %26, %25 : vector<8x1xf32>
    %28 = arith.mulf %27, %27 : vector<8x1xf32>
    %cst_9 = arith.constant 0.000000e+00 : f32
    %29 = vector.broadcast %cst_9 : f32 to vector<8x1xf32>
    %30 = arith.subf %29, %21 : vector<8x1xf32>
    %31 = arith.mulf %30, %28 : vector<8x1xf32>
    %32 = arith.mulf %31, %24 : vector<8x1xf32>
    %c8_i32 = arith.constant 8 : i32
    %33 = arith.muli %arg0, %c8_i32 : i32
    %34 = tpu.iota {dimensions = array<i32: 0>} : vector<8x1xi32>
    %35 = vector.broadcast %33 : i32 to vector<8x1xi32>
    %36 = arith.addi %35, %34 : vector<8x1xi32>
    %c8_i32_10 = arith.constant 8 : i32
    %37 = vector.broadcast %c8_i32_10 : i32 to vector<8x1xi32>
    %38 = arith.cmpi slt, %36, %37 : vector<8x1xi32>
    %39 = arith.extui %38 : vector<8x1xi1> to vector<8x1xi32>
    %40 = arith.sitofp %39 : vector<8x1xi32> to vector<8x1xf32>
    %41 = arith.mulf %32, %40 : vector<8x1xf32>
    %42 = vector.shape_cast %41 : vector<8x1xf32> to vector<1x8x1xf32>
    %cst_11 = arith.constant dense<0.000000e+00> : vector<1xf32>
    %43 = vector.multi_reduction <add>, %42, %cst_11 [1, 2] : vector<1x8x1xf32> to vector<1xf32>
    %44 = vector.shape_cast %43 : vector<1xf32> to vector<1x1x1xf32>
    %45 = vector.extract %44[0, 0, 0] : f32 from vector<1x1x1xf32>
    %c0_12 = arith.constant 0 : index
    %c0_13 = arith.constant 0 : index
    %46 = memref.load %arg4[%c0_12, %c0_13] : memref<1x1xf32, #tpu.memory_space<smem>>
    memref.store %45, %arg4[%c0_12, %c0_13] : memref<1x1xf32, #tpu.memory_space<smem>>
    return
  }
  func.func @transform_0(%arg0: i32) -> (i32, i32) {
    %c0_i32 = arith.constant 0 : i32
    %c0_i32_0 = arith.constant 0 : i32
    return %arg0, %c0_i32 : i32, i32
  }
  func.func @transform_1(%arg0: i32) -> (i32, i32) {
    %c0_i32 = arith.constant 0 : i32
    %c0_i32_0 = arith.constant 0 : i32
    return %arg0, %c0_i32 : i32, i32
  }
  func.func @transform_2(%arg0: i32) -> (i32, i32) {
    %c0_i32 = arith.constant 0 : i32
    %c0_i32_0 = arith.constant 0 : i32
    %c0_i32_1 = arith.constant 0 : i32
    return %c0_i32, %c0_i32_0 : i32, i32
  }
  func.func @transform_3(%arg0: i32) -> (i32, i32) {
    %c0_i32 = arith.constant 0 : i32
    %c0_i32_0 = arith.constant 0 : i32
    return %arg0, %c0_i32 : i32, i32
  }
}

</mosaic_0001>

<llo_original>
// kernel: tpu_custom_call.1
$region0: #{tpu_custom_call.1}
  #allocation0 [shape = 'u32[]', space=smem, size = 0x4, offset = 0x4, fixed_abs, tag = 'smem constant byte address 0x4 - core index']
  #allocation1 [shape = 'u32[144,128]{1,0:T(1,128)}', space=vmem, size = 0x12000, scoped, tag = 'internal scratch']
  %s0 = inlined_call_operand.vmem [shape: f32[8,128], index: 0, kind: input, shape index: {}]
  %s1 = inlined_call_operand.vmem [shape: s32[8,1], index: 1, kind: input, shape index: {}]
  %s2 = inlined_call_operand.vmem [shape: f32[1,128], index: 2, kind: input, shape index: {}]
  %s3 = inlined_call_operand.hbm [shape: f32[1,1], index: 3, kind: output, shape index: {}]
  %s4 = sld [smem:[#allocation0]]
  $region22: #{tpu_custom_call.1} parent=0
    _
  %s6 = ssub.s32 1, %s4
  %s7 = scalar_select 0, %s6, %s4
  $region1: #{tpu_custom_call.1} parent=0
    #allocation2 [shape = 'u8[512]{0}', space=smem, size = 0x200, scoped, tag = 'output window, operand 0, single buffered']
    #allocation3 [shape = 's32[1]{0}', space=sflag, size = 0x4, scoped, tag = 'scoped memory for tpu_custom_call.1']
    %8 = vsyncpa [#allocation3], 0
    // Predicated region
    $region2: #{tpu_custom_call.1} parent=1 // pred_check
      _
    $region3: #{tpu_custom_call.1} parent=1 // pred_check_branch
      %10 = sbr.rel (0) target = $region5
    $region4: #{tpu_custom_call.1} parent=1 // pred_region
      _
    $region5: #{tpu_custom_call.1} parent=1 // pred_fallthru
      _
    // Predicated region
    $region6: #{tpu_custom_call.1} parent=1 // pred_check
      _
    $region7: #{tpu_custom_call.1} parent=1 // pred_check_branch
      %12 = sbr.rel (0) target = $region9
    $region8: #{tpu_custom_call.1} parent=1 // pred_region
      _
    $region9: #{tpu_custom_call.1} parent=1 // pred_fallthru
      _
    // Predicated region
    $region10: #{tpu_custom_call.1} parent=1 // pred_check
      _
    $region11: #{tpu_custom_call.1} parent=1 // pred_check_branch
      %14 = sbr.rel (0) target = $region13
    $region12: #{tpu_custom_call.1} parent=1 // pred_region
      _
    $region13: #{tpu_custom_call.1} parent=1 // pred_fallthru
      _
    %v15 = vld [vmem:[%s0] sm:$0xff]
    %v16 = vld [vmem:[%s1] sm:$0xff]
    %v17 = vld [vmem:[%s2] sm:$0x1]
    %18 = vmax.xlane.f32.xlu0 %v15
    %v19 = vpop.xlane.xlu0 %18
    %v20 = vsub.f32 %v15, %v19
    %v21 = vmul.f32 %v20, 1.442695
    %v22 = vpow.pop %v21
    %23 = vadd.xlane.f32.xlu0 %v22
    %v24 = vpop.xlane.xlu0 %23
    %v25 = vlaneseq
    %v26 = vand.u32 %v25, 127
    %27 = vset.pattern.permute.xlu0 0
    %28 = vperm.xlu0 %27, %v16
    %v29 = vpop.permute.xlu0 %28
    %vm30 = vcmp.eq.s32.totalorder %v26, %v29
    %v31 = vsel %vm30, 1, 0
    %v32 = vcvt.s32.f32 %v31
    %v33 = vmul.f32 %v15, %v32
    %34 = vadd.xlane.f32.xlu0 %v33
    %v35 = vpop.xlane.xlu0 %34
    %v37 = vlaneseq
    %v38 = vshrl.u32 %v37, 7
    %v39 = vsub.s32 0, %v38
    %v40 = vrot.slane %v17, %v39
    %v42 = vmul.f32 %v40, %v32
    %43 = vadd.xlane.f32.xlu0 %v42
    %v44 = vpop.xlane.xlu0 %43
    %v45 = vsub.f32 %v35, %v19
    %v46 = vlog2.pop %v24
    %v47 = vmul.f32 %v46, 0.6931472
    %v48 = vsub.f32 %v45, %v47
    %v49 = vmul.f32 %v48, 1.442695
    %v50 = vpow.pop %v49
    %v51 = vsub.f32 1.0, %v50
    %v52 = vmul.f32 %v51, %v51
    %v53 = vsub.f32 0.0, %v44
    %v54 = vmul.f32 %v53, %v52
    %v55 = vmul.f32 %v54, %v48
    %s56 = smul.u32 0, 8
    %v57 = vlaneseq
    %v58 = vshrl.u32 %v57, 7
    %v59 = vstv %s56
    %v60 = vadd.s32 %v59, %v58
    %vm61 = vcmp.lt.s32.totalorder %v60, 8
    %v62 = vsel %vm61, 1, 0
    %v63 = vcvt.s32.f32 %v62
    %v64 = vmul.f32 %v55, %v63
    %vm65 = vcmask 7168
    %v66 = vsel %vm65, %v64, 0.0
    %67 = vadd.xlane.f32.xlu0 %v66
    %v68 = vpop.xlane.xlu0 %67
    %v69 = vrot.slane %v68, 4
    %v70 = vadd.f32 %v68, %v69
    %v71 = vrot.slane %v70, 2
    %v72 = vadd.f32 %v70, %v71
    %v73 = vrot.slane %v72, 1
    %v74 = vadd.f32 %v72, %v73
    %s75 = vtos %v74
    %s76 = scalar_lea.smem [#allocation2], 0
    %77 = sst [smem:[%s76]] %s75
    // Predicated region
    $region14: #{tpu_custom_call.1} parent=1 // pred_check
      _
    $region15: #{tpu_custom_call.1} parent=1 // pred_check_branch
      %79 = sbr.rel (0) target = $region17
    $region16: #{tpu_custom_call.1} parent=1 // pred_region
      %s81 = ssub.s32 16, 16
      %82 = vsyncadd [#allocation3], %s81
      %85 = dma.smem_to_hbm [#allocation2], 16, %s3, [#allocation3]
    $region17: #{tpu_custom_call.1} parent=1 // pred_fallthru
      _
    // Predicated region
    $region18: #{tpu_custom_call.1} parent=1 // pred_check
      _
    $region19: #{tpu_custom_call.1} parent=1 // pred_check_branch
      %87 = sbr.rel (0) target = $region21
    $region20: #{tpu_custom_call.1} parent=1 // pred_region
      %88 = dma.done [#allocation3], 16
    $region21: #{tpu_custom_call.1} parent=1 // pred_fallthru
      _
    %89 = sfence
    %90 = vsyncpa [#allocation3], 1

</llo_original>
